<compile_context>
chip_gen: v5e
topology: v5e:2x2
jax: 0.10.0
libtpu: 0.0.40
codegen_flags: <defaults>
</compile_context>

<pallas_src>
import functools
import math

import jax
import jax.numpy as jnp
from jax.experimental import pallas as pl
from jax.experimental.pallas import tpu as pltpu

LN_EPS = 1e-12
_VMEM_LIMIT = 48 * 1024 * 1024  # < 64 MiB physical on v7x, raises v5e's 16 MiB default


def _pick_tile(dim, target):
    """Largest tile <= target that divides dim (falls back to the full dim)."""
    if dim <= target:
        return dim
    t = target
    while dim % t != 0:
        t //= 2
        if t < 8:
            return dim
    return t


def _gelu(x):
    # TODO(synk): torch BERT uses the exact erf GELU; tanh approximation is used
    # here for portable Mosaic lowering (small numeric divergence).
    c = jnp.float32(math.sqrt(2.0 / math.pi))
    return 0.5 * x * (1.0 + jnp.tanh(c * (x + 0.044715 * x * x * x)))


# ----------------------------------------------------------------------------
# Generic tiled matmul: y = act(x @ w + b)
# ----------------------------------------------------------------------------
def _mm_kernel(x_ref, w_ref, b_ref, o_ref, acc_ref, *, activation):
    @pl.when(pl.program_id(2) == 0)
    def _init():
        acc_ref[...] = jnp.zeros_like(acc_ref)

    acc_ref[...] += jnp.dot(x_ref[...], w_ref[...],
                            preferred_element_type=jnp.float32)

    @pl.when(pl.program_id(2) == pl.num_programs(2) - 1)
    def _fin():
        y = acc_ref[...] + b_ref[...]
        if activation == "gelu":
            y = _gelu(y)
        elif activation == "tanh":
            y = jnp.tanh(y)
        o_ref[...] = y.astype(o_ref.dtype)


def linear(x, w, b, *, activation=None, out_dtype=jnp.bfloat16,
           tm=256, tn=256, tk=256):
    M, K = x.shape
    _, N = w.shape
    tm = _pick_tile(M, tm)
    tn = _pick_tile(N, tn)
    tk = _pick_tile(K, tk)
    return pl.pallas_call(
        functools.partial(_mm_kernel, activation=activation),
        grid=(M // tm, N // tn, K // tk),
        in_specs=[
            pl.BlockSpec((tm, tk), lambda i, j, k: (i, k)),
            pl.BlockSpec((tk, tn), lambda i, j, k: (k, j)),
            pl.BlockSpec((1, tn), lambda i, j, k: (0, j)),
        ],
        out_specs=pl.BlockSpec((tm, tn), lambda i, j, k: (i, j)),
        out_shape=jax.ShapeDtypeStruct((M, N), out_dtype),
        scratch_shapes=[pltpu.VMEM((tm, tn), jnp.float32)],
        compiler_params=pltpu.CompilerParams(
            dimension_semantics=("parallel", "parallel", "arbitrary"),
            vmem_limit_bytes=_VMEM_LIMIT),
    )(x, w, b.reshape(1, N))


# ----------------------------------------------------------------------------
# Matmul with fused residual add + LayerNorm epilogue: LN(x @ w + b + residual)
# (LN is over the full output feature dim, so N is kept untiled.)
# ----------------------------------------------------------------------------
def _mm_res_ln_kernel(x_ref, w_ref, b_ref, res_ref, g_ref, bt_ref, o_ref, acc_ref):
    @pl.when(pl.program_id(1) == 0)
    def _init():
        acc_ref[...] = jnp.zeros_like(acc_ref)

    acc_ref[...] += jnp.dot(x_ref[...], w_ref[...],
                            preferred_element_type=jnp.float32)

    @pl.when(pl.program_id(1) == pl.num_programs(1) - 1)
    def _fin():
        h = acc_ref[...] + b_ref[...] + res_ref[...].astype(jnp.float32)
        mu = jnp.mean(h, axis=-1, keepdims=True)
        d = h - mu
        var = jnp.mean(d * d, axis=-1, keepdims=True)
        y = d * jax.lax.rsqrt(var + LN_EPS) * g_ref[...] + bt_ref[...]
        o_ref[...] = y.astype(o_ref.dtype)


def linear_residual_ln(x, w, b, residual, gamma, beta, *, tm=256, tk=256):
    M, K = x.shape
    _, N = w.shape
    tm = _pick_tile(M, tm)
    tk = _pick_tile(K, tk)
    return pl.pallas_call(
        _mm_res_ln_kernel,
        grid=(M // tm, K // tk),
        in_specs=[
            pl.BlockSpec((tm, tk), lambda i, k: (i, k)),
            pl.BlockSpec((tk, N), lambda i, k: (k, 0)),
            pl.BlockSpec((1, N), lambda i, k: (0, 0)),
            pl.BlockSpec((tm, N), lambda i, k: (i, 0)),
            pl.BlockSpec((1, N), lambda i, k: (0, 0)),
            pl.BlockSpec((1, N), lambda i, k: (0, 0)),
        ],
        out_specs=pl.BlockSpec((tm, N), lambda i, k: (i, 0)),
        out_shape=jax.ShapeDtypeStruct((M, N), jnp.bfloat16),
        scratch_shapes=[pltpu.VMEM((tm, N), jnp.float32)],
        compiler_params=pltpu.CompilerParams(
            dimension_semantics=("parallel", "arbitrary"),
            vmem_limit_bytes=_VMEM_LIMIT),
    )(x, w, b.reshape(1, N), residual, gamma.reshape(1, N), beta.reshape(1, N))


# ----------------------------------------------------------------------------
# Fused FFN block: LN(GELU(x @ w1 + b1) @ w2 + b2 + x)
# Intermediate activation never leaves VMEM (tiled over the intermediate dim).
# ----------------------------------------------------------------------------
def _ffn_kernel(x_ref, w1_ref, b1_ref, w2_ref, b2_ref, g_ref, bt_ref,
                o_ref, acc_ref):
    @pl.when(pl.program_id(1) == 0)
    def _init():
        acc_ref[...] = jnp.zeros_like(acc_ref)

    inter = jnp.dot(x_ref[...], w1_ref[...],
                    preferred_element_type=jnp.float32) + b1_ref[...]
    inter = _gelu(inter)
    acc_ref[...] += jnp.dot(inter.astype(jnp.bfloat16), w2_ref[...],
                            preferred_element_type=jnp.float32)

    @pl.when(pl.program_id(1) == pl.num_programs(1) - 1)
    def _fin():
        h = acc_ref[...] + b2_ref[...] + x_ref[...].astype(jnp.float32)
        mu = jnp.mean(h, axis=-1, keepdims=True)
        d = h - mu
        var = jnp.mean(d * d, axis=-1, keepdims=True)
        y = d * jax.lax.rsqrt(var + LN_EPS) * g_ref[...] + bt_ref[...]
        o_ref[...] = y.astype(o_ref.dtype)


def ffn_residual_ln(x, w1, b1, w2, b2, gamma, beta, *, tm=256, ti=512):
    M, H = x.shape
    _, I = w1.shape
    tm = _pick_tile(M, tm)
    ti = _pick_tile(I, ti)
    return pl.pallas_call(
        _ffn_kernel,
        grid=(M // tm, I // ti),
        in_specs=[
            pl.BlockSpec((tm, H), lambda i, t: (i, 0)),
            pl.BlockSpec((H, ti), lambda i, t: (0, t)),
            pl.BlockSpec((1, ti), lambda i, t: (0, t)),
            pl.BlockSpec((ti, H), lambda i, t: (t, 0)),
            pl.BlockSpec((1, H), lambda i, t: (0, 0)),
            pl.BlockSpec((1, H), lambda i, t: (0, 0)),
            pl.BlockSpec((1, H), lambda i, t: (0, 0)),
        ],
        out_specs=pl.BlockSpec((tm, H), lambda i, t: (i, 0)),
        out_shape=jax.ShapeDtypeStruct((M, H), jnp.bfloat16),
        scratch_shapes=[pltpu.VMEM((tm, H), jnp.float32)],
        compiler_params=pltpu.CompilerParams(
            dimension_semantics=("parallel", "arbitrary"),
            vmem_limit_bytes=_VMEM_LIMIT),
    )(x, w1, b1.reshape(1, I), w2, b2.reshape(1, H),
      gamma.reshape(1, H), beta.reshape(1, H))


# ----------------------------------------------------------------------------
# Plain LayerNorm (embedding normalization — no dummy zero residual)
# ----------------------------------------------------------------------------
def _ln_kernel(x_ref, g_ref, b_ref, o_ref):
    x = x_ref[...].astype(jnp.float32)
    mu = jnp.mean(x, axis=-1, keepdims=True)
    d = x - mu
    var = jnp.mean(d * d, axis=-1, keepdims=True)
    o_ref[...] = (d * jax.lax.rsqrt(var + LN_EPS) * g_ref[...]
                  + b_ref[...]).astype(o_ref.dtype)


def layernorm(x, gamma, beta, *, tm=256, out_dtype=jnp.bfloat16):
    M, H = x.shape
    tm = _pick_tile(M, tm)
    return pl.pallas_call(
        _ln_kernel,
        grid=(M // tm,),
        in_specs=[
            pl.BlockSpec((tm, H), lambda i: (i, 0)),
            pl.BlockSpec((1, H), lambda i: (0, 0)),
            pl.BlockSpec((1, H), lambda i: (0, 0)),
        ],
        out_specs=pl.BlockSpec((tm, H), lambda i: (i, 0)),
        out_shape=jax.ShapeDtypeStruct((M, H), out_dtype),
        compiler_params=pltpu.CompilerParams(
            dimension_semantics=("parallel",),
            vmem_limit_bytes=_VMEM_LIMIT),
    )(x, gamma.reshape(1, H), beta.reshape(1, H))


# ----------------------------------------------------------------------------
# Multi-head self-attention: all heads of one batch element per grid step.
# qkv is the fused (B, S, 3H) projection; heads are sliced from the H axis
# inside the kernel (no host-side split/merge transposes).
# ----------------------------------------------------------------------------
def _attn_kernel(qkv_ref, bias_ref, o_ref, *, num_heads, head_dim, hidden, scale):
    row = qkv_ref[0]                       # (S, 3H) bf16
    bias = bias_ref[0]                     # (1, S)  f32 additive mask bias
    ctxs = []
    for h in range(num_heads):             # static unrolled loop over heads
        q = row[:, h * head_dim:(h + 1) * head_dim]
        k = row[:, hidden + h * head_dim:hidden + (h + 1) * head_dim]
        v = row[:, 2 * hidden + h * head_dim:2 * hidden + (h + 1) * head_dim]
        s = jax.lax.dot_general(q, k, (((1,), (1,)), ((), ())),
                                preferred_element_type=jnp.float32)
        s = s * scale + bias                                  # (S,S) + (1,S)
        s = s - jnp.max(s, axis=-1, keepdims=True)            # stable softmax
        p = jnp.exp(s)
        p = p * pl.reciprocal(jnp.sum(p, axis=-1, keepdims=True), approx=True)
        ctxs.append(jnp.dot(p.astype(row.dtype), v,
                            preferred_element_type=jnp.float32))
    o_ref[0] = jnp.concatenate(ctxs, axis=-1).astype(o_ref.dtype)  # lane-dense store


def multi_head_attention(qkv, attn_bias, num_heads):
    # qkv: (B, S, 3H) bf16 ; attn_bias: (B, 1, S) f32
    B, S, H3 = qkv.shape
    H = H3 // 3
    dh = H // num_heads
    # TODO(synk): for long sequences (S >~ 1k) switch to an online-softmax (flash)
    # grid over (q_tile, kv_tile); full SxS scores are fine at BERT-sized S.
    return pl.pallas_call(
        functools.partial(_attn_kernel, num_heads=num_heads, head_dim=dh,
                          hidden=H, scale=1.0 / math.sqrt(dh)),
        grid=(B,),
        in_specs=[
            pl.BlockSpec((1, S, H3), lambda b: (b, 0, 0)),
            pl.BlockSpec((1, 1, S), lambda b: (b, 0, 0)),
        ],
        out_specs=pl.BlockSpec((1, S, H), lambda b: (b, 0, 0)),
        out_shape=jax.ShapeDtypeStruct((B, S, H), jnp.bfloat16),
        compiler_params=pltpu.CompilerParams(
            dimension_semantics=("parallel",),
            vmem_limit_bytes=_VMEM_LIMIT),
    )(qkv, attn_bias)


# ----------------------------------------------------------------------------
# Parameter construction (deterministic, synthetic). Matmul weights in bf16.
# ----------------------------------------------------------------------------
def init_params(key, *, vocab, hidden, n_layers, n_heads, intermediate,
                max_pos, num_classes):
    def nrm(k, shape, dtype=jnp.bfloat16):
        return (0.02 * jax.random.normal(k, shape, dtype=jnp.float32)).astype(dtype)

    keys = iter(jax.random.split(key, 8 + 8 * n_layers))
    nc_pad = ((num_classes + 127) // 128) * 128          # lane-dense classifier
    wfc = nrm(next(keys), (hidden, num_classes), jnp.float32)
    wfc_pad = jnp.zeros((hidden, nc_pad), jnp.bfloat16)
    wfc_pad = wfc_pad.at[:, :num_classes].set(wfc.astype(jnp.bfloat16))

    p = {
        "word_emb": nrm(next(keys), (vocab, hidden), jnp.float32),
        "pos_emb": nrm(next(keys), (max_pos, hidden), jnp.float32),
        "type_emb": nrm(next(keys), (2, hidden), jnp.float32),
        "emb_ln_g": jnp.ones((hidden,), jnp.float32),
        "emb_ln_b": jnp.zeros((hidden,), jnp.float32),
        "wp": nrm(next(keys), (hidden, hidden)),
        "bp": jnp.zeros((hidden,), jnp.float32),
        "wfc": wfc_pad,                                  # (hidden, nc_pad) bf16
        "bfc": jnp.zeros((nc_pad,), jnp.float32),
        "num_classes": num_classes,
        "layers": [],
    }
    for _ in range(n_layers):
        p["layers"].append({
            "wqkv": nrm(next(keys), (hidden, 3 * hidden)),   # fused Q|K|V
            "bqkv": jnp.zeros((3 * hidden,), jnp.float32),
            "wo": nrm(next(keys), (hidden, hidden)),
            "bo": jnp.zeros((hidden,), jnp.float32),
            "ln1_g": jnp.ones((hidden,), jnp.float32),
            "ln1_b": jnp.zeros((hidden,), jnp.float32),
            "w1": nrm(next(keys), (hidden, intermediate)),
            "b1": jnp.zeros((intermediate,), jnp.float32),
            "w2": nrm(next(keys), (intermediate, hidden)),
            "b2": jnp.zeros((hidden,), jnp.float32),
            "ln2_g": jnp.ones((hidden,), jnp.float32),
            "ln2_b": jnp.zeros((hidden,), jnp.float32),
        })
    return p


# ----------------------------------------------------------------------------
# Forward pass (mirrors Bert_FT.forward)
# ----------------------------------------------------------------------------
def bert_ft_forward(params, x, *, num_heads):
    context = x[0]            # (B, S) token ids          == x[0] in the module
    mask = x[2]               # (B, S) attention mask     == x[2] in the module
    B, S = context.shape
    H = params["word_emb"].shape[1]

    # --- embeddings (gathers are host-side glue; LayerNorm is a Pallas kernel)
    pos_ids = jnp.arange(S, dtype=jnp.int32)
    emb = (jnp.take(params["word_emb"], context, axis=0)
           + jnp.take(params["pos_emb"], pos_ids, axis=0)[None, :, :]
           + params["type_emb"][0][None, None, :])        # token_type_ids = 0
    h = layernorm(emb.reshape(B * S, H).astype(jnp.float32),
                  params["emb_ln_g"], params["emb_ln_b"])  # (B*S, H) bf16

    # additive attention bias, computed once: (B, 1, S)
    attn_bias = ((1.0 - mask.astype(jnp.float32))
                 * jnp.float32(-10000.0)).reshape(B, 1, S)

    # --- transformer encoder layers -----------------------------------------
    for lp in params["layers"]:
        qkv = linear(h, lp["wqkv"], lp["bqkv"])                     # (B*S, 3H)
        ctx = multi_head_attention(qkv.reshape(B, S, 3 * H),
                                   attn_bias, num_heads)            # (B, S, H)
        h = linear_residual_ln(ctx.reshape(B * S, H), lp["wo"], lp["bo"],
                               h, lp["ln1_g"], lp["ln1_b"])         # attn out + LN
        h = ffn_residual_ln(h, lp["w1"], lp["b1"], lp["w2"], lp["b2"],
                            lp["ln2_g"], lp["ln2_b"])               # FFN + LN

    # --- pooler (first token, dense + tanh) and classifier -------------------
    first_tok = h.reshape(B, S, H)[:, 0, :]                         # (B, H)
    pooled = linear(first_tok, params["wp"], params["bp"], activation="tanh")
    logits_pad = linear(pooled, params["wfc"], params["bfc"],
                        out_dtype=jnp.float32)                      # (B, 128)
    return logits_pad[:, :params["num_classes"]]


# ----------------------------------------------------------------------------
if __name__ == "__main__":
    # Small config consistent with the module: hidden_size=32, num_classes=3.
    B, S = 2, 8
    HIDDEN, N_HEADS, N_LAYERS, INTER = 32, 2, 2, 64
    VOCAB, MAX_POS, NUM_CLASSES = 100, 64, 3

    params = init_params(jax.random.PRNGKey(0), vocab=VOCAB, hidden=HIDDEN,
                         n_layers=N_LAYERS, n_heads=N_HEADS,
                         intermediate=INTER, max_pos=MAX_POS,
                         num_classes=NUM_CLASSES)

    k_ids, _ = jax.random.split(jax.random.PRNGKey(0))
    context = jax.random.randint(k_ids, (B, S), 0, VOCAB, dtype=jnp.int32)
    seq_len = jnp.full((B,), S, dtype=jnp.int32)            # x[1]: unused (matches module)
    mask = jnp.ones((B, S), dtype=jnp.int32).at[1, 6:].set(0)  # some padding
    x = (context, seq_len, mask)

    out = bert_ft_forward(params, x, num_heads=N_HEADS)
    jax.block_until_ready(out)
    assert out.shape == (B, NUM_CLASSES)
    print("KERNEL_OK")
</pallas_src>

<mosaic_0001>
module attributes {stable_mosaic.version = 11 : i64} {
  func.func @_ln_kernel(%arg0: i32, %arg1: memref<16x32xf32, #tpu.memory_space<vmem>>, %arg2: memref<1x32xf32, #tpu.memory_space<vmem>>, %arg3: memref<1x32xf32, #tpu.memory_space<vmem>>, %arg4: memref<16x32xbf16, #tpu.memory_space<vmem>>) attributes {dimension_semantics = [#tpu.dimension_semantics<parallel>], iteration_bounds = array<i64: 1>, scalar_prefetch = 0 : i64, scratch_operands = 0 : i64, tpu.core_type = #tpu.core_type<tc>, window_params = [{transform_indices = @transform_0, window_bounds = array<i64: 16, 32>}, {pipeline_mode = #tpu.pipeline_mode<synchronous>, transform_indices = @transform_1, window_bounds = array<i64: 1, 32>}, {pipeline_mode = #tpu.pipeline_mode<synchronous>, transform_indices = @transform_2, window_bounds = array<i64: 1, 32>}, {transform_indices = @transform_3, window_bounds = array<i64: 16, 32>}]} {
    %c0 = arith.constant 0 : index
    %c0_0 = arith.constant 0 : index
    %0 = vector.load %arg1[%c0, %c0_0] : memref<16x32xf32, #tpu.memory_space<vmem>>, vector<16x32xf32>
    %cst = arith.constant dense<0.000000e+00> : vector<16xf32>
    %1 = vector.multi_reduction <add>, %0, %cst [1] : vector<16x32xf32> to vector<16xf32>
    %2 = vector.shape_cast %1 : vector<16xf32> to vector<16x1xf32>
    %cst_1 = arith.constant 3.200000e+01 : f32
    %3 = vector.broadcast %cst_1 : f32 to vector<16x1xf32>
    %4 = arith.divf %2, %3 : vector<16x1xf32>
    %5 = vector.broadcast %4 : vector<16x1xf32> to vector<16x32xf32>
    %6 = arith.subf %0, %5 : vector<16x32xf32>
    %7 = arith.mulf %6, %6 : vector<16x32xf32>
    %cst_2 = arith.constant dense<0.000000e+00> : vector<16xf32>
    %8 = vector.multi_reduction <add>, %7, %cst_2 [1] : vector<16x32xf32> to vector<16xf32>
    %9 = vector.shape_cast %8 : vector<16xf32> to vector<16x1xf32>
    %cst_3 = arith.constant 3.200000e+01 : f32
    %10 = vector.broadcast %cst_3 : f32 to vector<16x1xf32>
    %11 = arith.divf %9, %10 : vector<16x1xf32>
    %cst_4 = arith.constant 9.99999996E-13 : f32
    %12 = vector.broadcast %cst_4 : f32 to vector<16x1xf32>
    %13 = arith.addf %11, %12 : vector<16x1xf32>
    %14 = math.rsqrt %13 : vector<16x1xf32>
    %15 = vector.broadcast %14 : vector<16x1xf32> to vector<16x32xf32>
    %16 = arith.mulf %6, %15 : vector<16x32xf32>
    %c0_5 = arith.constant 0 : index
    %c0_6 = arith.constant 0 : index
    %17 = vector.load %arg2[%c0_5, %c0_6] : memref<1x32xf32, #tpu.memory_space<vmem>>, vector<1x32xf32>
    %18 = vector.broadcast %17 : vector<1x32xf32> to vector<16x32xf32>
    %19 = arith.mulf %16, %18 : vector<16x32xf32>
    %c0_7 = arith.constant 0 : index
    %c0_8 = arith.constant 0 : index
    %20 = vector.load %arg3[%c0_7, %c0_8] : memref<1x32xf32, #tpu.memory_space<vmem>>, vector<1x32xf32>
    %21 = vector.broadcast %20 : vector<1x32xf32> to vector<16x32xf32>
    %22 = arith.addf %19, %21 : vector<16x32xf32>
    %23 = arith.truncf %22 : vector<16x32xf32> to vector<16x32xbf16>
    %c0_9 = arith.constant 0 : index
    %c0_10 = arith.constant 0 : index
    %24 = vector.load %arg4[%c0_9, %c0_10] : memref<16x32xbf16, #tpu.memory_space<vmem>>, vector<16x32xbf16>
    tpu.vector_store %arg4[%c0_9, %c0_10], %23 {strides = array<i32>} : memref<16x32xbf16, #tpu.memory_space<vmem>>, vector<16x32xbf16>,
    return
  }
  func.func @transform_0(%arg0: i32) -> (i32, i32) {
    %c0_i32 = arith.constant 0 : i32
    %c0_i32_0 = arith.constant 0 : i32
    return %arg0, %c0_i32 : i32, i32
  }
  func.func @transform_1(%arg0: i32) -> (i32, i32) {
    %c0_i32 = arith.constant 0 : i32
    %c0_i32_0 = arith.constant 0 : i32
    %c0_i32_1 = arith.constant 0 : i32
    return %c0_i32, %c0_i32_0 : i32, i32
  }
  func.func @transform_2(%arg0: i32) -> (i32, i32) {
    %c0_i32 = arith.constant 0 : i32
    %c0_i32_0 = arith.constant 0 : i32
    %c0_i32_1 = arith.constant 0 : i32
    return %c0_i32, %c0_i32_0 : i32, i32
  }
  func.func @transform_3(%arg0: i32) -> (i32, i32) {
    %c0_i32 = arith.constant 0 : i32
    %c0_i32_0 = arith.constant 0 : i32
    return %arg0, %c0_i32 : i32, i32
  }
}

</mosaic_0001>

<llo_original>
// kernel: tpu_custom_call.1
$region0: #{tpu_custom_call.1}
  #allocation0 [shape = 'u32[]', space=smem, size = 0x4, offset = 0x4, fixed_abs, tag = 'smem constant byte address 0x4 - core index']
  #allocation1 [shape = 'u32[72,128]{1,0:T(1,128)}', space=vmem, size = 0x9000, scoped, tag = 'internal scratch']
  %s0 = inlined_call_operand.hbm [shape: f32[16,32], index: 0, kind: input, shape index: {}]
  %s1 = inlined_call_operand.hbm [shape: f32[1,32], index: 1, kind: input, shape index: {}]
  %s2 = inlined_call_operand.vmem [shape: f32[1,32], index: 2, kind: input, shape index: {}]
  %s3 = inlined_call_operand.hbm [shape: bf16[16,32], index: 3, kind: output, shape index: {}]
  %s4 = sld [smem:[#allocation0]]
  $region30: #{tpu_custom_call.1} parent=0
    _
  %s6 = ssub.s32 1, %s4
  %s7 = scalar_select 0, %s6, %s4
  $region1: #{tpu_custom_call.1} parent=0
    #allocation2 [shape = 'u8[8192]{0}', space=vmem, size = 0x2000, scoped, tag = 'input window, operand 0, single buffered']
    #allocation3 [shape = 's32[1]{0}', space=sflag, size = 0x4, scoped, tag = 'scoped memory for tpu_custom_call.1']
    #allocation4 [shape = 's32[1]{0}', space=sflag, size = 0x4, scoped, tag = 'scoped memory for tpu_custom_call.1']
    #allocation5 [shape = 'u8[512]{0}', space=vmem, size = 0x400, scoped, tag = 'input window, operand 1, single buffered']
    #allocation6 [shape = 's32[1]{0}', space=sflag, size = 0x4, scoped, tag = 'scoped memory for tpu_custom_call.1']
    #allocation7 [shape = 'u8[4096]{0}', space=vmem, size = 0x1000, scoped, tag = 'output window, operand 0, single buffered']
    %8 = vsyncpa [#allocation3], 0
    %9 = vsyncpa [#allocation6], 0
    %10 = vsyncpa [#allocation4], 0
    // Predicated region
    $region2: #{tpu_custom_call.1} parent=1 // pred_check
      _
    $region3: #{tpu_custom_call.1} parent=1 // pred_check_branch
      %12 = sbr.rel (0) target = $region5
    $region4: #{tpu_custom_call.1} parent=1 // pred_region
      %14 = vsyncadd [#allocation3], 0
      %s15 = sshll.u32 %s0, 4
      %s16 = int_to_ptr.hbm [resolvable:$true] %s15
      %s17 = sshll.u32 [#allocation2], 4
      %s18 = int_to_ptr.vmem [resolvable:$true] %s17
      %23 = dma.hbm_to_vmem [thread:$0]  %s16, 256, %s18, [#allocation3], 128, 128, 8
    $region5: #{tpu_custom_call.1} parent=1 // pred_fallthru
      _
    // Predicated region
    $region6: #{tpu_custom_call.1} parent=1 // pred_check
      _
    $region7: #{tpu_custom_call.1} parent=1 // pred_check_branch
      %25 = sbr.rel (0) target = $region9
    $region8: #{tpu_custom_call.1} parent=1 // pred_region
      %27 = vsyncadd [#allocation6], 0
      %s29 = sshll.u32 %s1, 4
      %s30 = int_to_ptr.hbm [resolvable:$true] %s29
      %s31 = sshll.u32 [#allocation5], 4
      %s32 = int_to_ptr.vmem [resolvable:$true] %s31
      %34 = dma.hbm_to_vmem [thread:$0]  %s30, 16, %s32, [#allocation6]
    $region9: #{tpu_custom_call.1} parent=1 // pred_fallthru
      _
    // Predicated region
    $region10: #{tpu_custom_call.1} parent=1 // pred_check
      _
    $region11: #{tpu_custom_call.1} parent=1 // pred_check_branch
      %36 = sbr.rel (0) target = $region13
    $region12: #{tpu_custom_call.1} parent=1 // pred_region
      _
    $region13: #{tpu_custom_call.1} parent=1 // pred_fallthru
      _
    // Predicated region
    $region14: #{tpu_custom_call.1} parent=1 // pred_check
      _
    $region15: #{tpu_custom_call.1} parent=1 // pred_check_branch
      %38 = sbr.rel (0) target = $region17
    $region16: #{tpu_custom_call.1} parent=1 // pred_region
      %40 = dma.done [#allocation3], 256
    $region17: #{tpu_custom_call.1} parent=1 // pred_fallthru
      _
    // Predicated region
    $region18: #{tpu_custom_call.1} parent=1 // pred_check
      _
    $region19: #{tpu_custom_call.1} parent=1 // pred_check_branch
      %42 = sbr.rel (0) target = $region21
    $region20: #{tpu_custom_call.1} parent=1 // pred_region
      %44 = dma.done [#allocation6], 16
    $region21: #{tpu_custom_call.1} parent=1 // pred_fallthru
      _
    %v45 = vld [vmem:[#allocation2] sm:$0xff]
    %v46 = vld [vmem:[#allocation2 + $0x8] sm:$0xff]
    %vm47 = vcmask 261120
    %v48 = vsel %vm47, %v45, 0.0
    %49 = vadd.xlane.f32.xlu0 %v48
    %v50 = vpop.xlane.xlu0 %49
    %v51 = vsel %vm47, %v46, 0.0
    %52 = vadd.xlane.f32.xlu0 %v51
    %v53 = vpop.xlane.xlu0 %52
    %v54 = vrcp.pop 32.0
    %v55 = vmul.f32 32.0, %v54
    %v56 = vsub.f32 1.0, %v55
    %v57 = vmul.f32 %v54, %v56
    %v58 = vadd.f32 %v54, %v57
    %vm59 = vweird.f32 %v54
    %v60 = vsel %vm59, %v54, %v58
    %v61 = vmul.f32 %v50, %v60
    %v62 = vmul.f32 %v53, %v60
    %v63 = vsub.f32 %v45, %v61
    %v64 = vsub.f32 %v46, %v62
    %v65 = vmul.f32 %v63, %v63
    %v66 = vmul.f32 %v64, %v64
    %v67 = vsel %vm47, %v65, 0.0
    %68 = vadd.xlane.f32.xlu0 %v67
    %v69 = vpop.xlane.xlu0 %68
    %v70 = vsel %vm47, %v66, 0.0
    %71 = vadd.xlane.f32.xlu0 %v70
    %v72 = vpop.xlane.xlu0 %71
    %v73 = vmul.f32 %v69, %v60
    %v74 = vmul.f32 %v72, %v60
    %v75 = vadd.f32 %v73, 1e-12
    %v76 = vadd.f32 %v74, 1e-12
    %v77 = vrsqrt.pop %v75
    %v78 = vmul.f32 %v77, %v75
    %v79 = vmul.f32 %v78, %v77
    %v80 = vmul.f32 0.5, %v79
    %v81 = vsub.f32 1.5, %v80
    %v82 = vmul.f32 %v77, %v81
    %vm83 = vweird.f32 %v75
    %vm84 = vweird.f32 %v77
    %vm85 = vmor %vm83, %vm84
    %v86 = vsel %vm85, %v77, %v82
    %v87 = vrsqrt.pop %v76
    %v88 = vmul.f32 %v87, %v76
    %v89 = vmul.f32 %v88, %v87
    %v90 = vmul.f32 0.5, %v89
    %v91 = vsub.f32 1.5, %v90
    %v92 = vmul.f32 %v87, %v91
    %vm93 = vweird.f32 %v76
    %vm94 = vweird.f32 %v87
    %vm95 = vmor %vm93, %vm94
    %v96 = vsel %vm95, %v87, %v92
    %v97 = vmul.f32 %v63, %v86
    %v98 = vmul.f32 %v64, %v96
    %v99 = vld [vmem:[#allocation5] sm:$0x1]
    %v101 = vperm.slane %v99, 0
    %v103 = vmul.f32 %v97, %v101
    %v104 = vmul.f32 %v98, %v101
    %v105 = vld [vmem:[%s2] sm:$0x1]
    %v107 = vperm.slane %v105, 0
    %v109 = vadd.f32 %v103, %v107
    %v110 = vadd.f32 %v104, %v107
    %v111 = vpack.c.bf16 %v109, %v109
    %v112 = vpack.c.bf16 %v110, %v110
    %vm113 = vcmask 257024
    %114 = vst.msk [vmem:[#allocation7] sm:$0xf] %vm113, %v111
    %115 = vst.msk [vmem:[#allocation7 + $0x4] sm:$0xf] %vm113, %v112
    // Predicated region
    $region22: #{tpu_custom_call.1} parent=1 // pred_check
      _
    $region23: #{tpu_custom_call.1} parent=1 // pred_check_branch
      %117 = sbr.rel (0) target = $region25
    $region24: #{tpu_custom_call.1} parent=1 // pred_region
      %119 = vsyncadd [#allocation4], 0
      %s120 = sshll.u32 [#allocation7], 4
      %s121 = int_to_ptr.vmem [resolvable:$true] %s120
      %s122 = sshll.u32 %s3, 4
      %s123 = int_to_ptr.hbm [resolvable:$true] %s122
      %128 = dma.vmem_to_hbm [thread:$0]  %s121, 128, %s123, [#allocation4], 64, 64, 4
    $region25: #{tpu_custom_call.1} parent=1 // pred_fallthru
      _
    // Predicated region
    $region26: #{tpu_custom_call.1} parent=1 // pred_check
      _
    $region27: #{tpu_custom_call.1} parent=1 // pred_check_branch
      %130 = sbr.rel (0) target = $region29
    $region28: #{tpu_custom_call.1} parent=1 // pred_region
      %132 = dma.done [#allocation4], 128
    $region29: #{tpu_custom_call.1} parent=1 // pred_fallthru
      _
    %133 = vsyncpa [#allocation3], 1
    %134 = vsyncpa [#allocation6], 1
    %135 = vsyncpa [#allocation4], 1

</llo_original>
